<compile_context>
chip_gen: v5e
topology: v5e:2x2
jax: 0.10.0
libtpu: 0.0.40
codegen_flags: <defaults>
</compile_context>

<pallas_src>
import functools
import math

import jax
import jax.numpy as jnp
from jax import lax
from jax.experimental import pallas as pl
from jax.experimental.pallas import tpu as pltpu


def _encoder_block_kernel(
    x_ref,                # (1, L, E) f32  this batch's rows (residual / LN path)
    wqkv_ref, bqkv_ref,   # (E, 3E) bf16 [Q|K|V] (Q pre-scaled by 1/sqrt(dh)) / (1, 3E) f32
    wo_ref, bo_ref,       # (E, E) bf16 / (1, E) f32
    w1_ref, b1_ref,       # (E, 2E) bf16 / (1, 2E) f32
    w2_ref, b2_ref,       # (2E, E) bf16 / (1, E)  f32
    g1_ref, be1_ref,      # (1, E) f32  LayerNorm 1
    g2_ref, be2_ref,      # (1, E) f32  LayerNorm 2
    o_ref,                # (1, L, E) f32
    *, n_head, head_dim, n_embed):
    E = n_embed
    dh = head_dim

    x = x_ref[0]                                 # (L, E) f32
    xb = x.astype(jnp.bfloat16)                  # single cast per grid step

    # --- one wide QKV projection: f32 accumulate + bias, one cast back to bf16 ---
    qkv = (jnp.dot(xb, wqkv_ref[...], preferred_element_type=jnp.float32)
           + bqkv_ref[...]).astype(jnp.bfloat16)                       # (L, 3E)

    # --- per-head attention, statically unrolled; no mask needed (one batch per step) ---
    pv_heads = []
    for h in range(n_head):
        q_h = qkv[:, h * dh:(h + 1) * dh]                               # scale already folded in
        k_h = qkv[:, E + h * dh:E + (h + 1) * dh]
        v_h = qkv[:, 2 * E + h * dh:2 * E + (h + 1) * dh]
        s = jnp.einsum("qd,kd->qk", q_h, k_h,
                       preferred_element_type=jnp.float32)              # (L, L) f32
        s = s - jnp.max(s, axis=-1, keepdims=True)
        p = jnp.exp(s)
        denom = jnp.sum(p, axis=-1, keepdims=True)
        pv = jnp.dot(p.astype(jnp.bfloat16), v_h,
                     preferred_element_type=jnp.float32)                # (L, dh)
        # normalize after PV: (L, dh) multiply instead of (L, L); reciprocal on the EUP slot.
        pv_heads.append(pv * pl.reciprocal(denom, approx=True))
    attn_cat = jnp.concatenate(pv_heads, axis=-1).astype(jnp.bfloat16)  # (L, E)

    # --- single K=E out-projection + residual + LayerNorm 1 ---
    attn = jnp.dot(attn_cat, wo_ref[...],
                   preferred_element_type=jnp.float32) + bo_ref[...]
    x1 = x + attn
    mu1 = jnp.mean(x1, axis=-1, keepdims=True)
    xc1 = x1 - mu1
    var1 = jnp.mean(xc1 * xc1, axis=-1, keepdims=True)
    x1n = xc1 * lax.rsqrt(var1 + 1e-5) * g1_ref[...] + be1_ref[...]

    # --- FFN (Linear -> ReLU -> Linear) ---
    h1 = jnp.dot(x1n.astype(jnp.bfloat16), w1_ref[...],
                 preferred_element_type=jnp.float32) + b1_ref[...]
    h1 = jnp.maximum(h1, 0.0)
    ff = jnp.dot(h1.astype(jnp.bfloat16), w2_ref[...],
                 preferred_element_type=jnp.float32) + b2_ref[...]

    # --- residual + LayerNorm 2 ---
    x2 = x1n + ff
    mu2 = jnp.mean(x2, axis=-1, keepdims=True)
    xc2 = x2 - mu2
    var2 = jnp.mean(xc2 * xc2, axis=-1, keepdims=True)
    o_ref[0] = (xc2 * lax.rsqrt(var2 + 1e-5) * g2_ref[...] + be2_ref[...]
                ).astype(o_ref.dtype)


def encoder_block_pallas(x_lne, params, n_head):
    """x_lne: (L, N, E) float32, PyTorch MultiheadAttention default (seq, batch, embed)."""
    L, N, E = x_lne.shape
    H = n_head
    dh = E // H
    bf16, f32 = jnp.bfloat16, jnp.float32
    scale = 1.0 / math.sqrt(dh)

    # Batch-major so each grid step owns one batch's contiguous (L, E) slab.
    x_nle = jnp.transpose(x_lne, (1, 0, 2)).astype(f32)                 # (N, L, E)

    ipw, ipb = params["in_proj_w"], params["in_proj_b"]                 # (3E, E), (3E,)
    wq, wk, wv = ipw[0:E], ipw[E:2 * E], ipw[2 * E:3 * E]
    bq, bk, bv = ipb[0:E], ipb[E:2 * E], ipb[2 * E:3 * E]
    # Combined QKV arranged for x @ W; 1/sqrt(dh) folded into the Q weight/bias columns.
    wqkv = jnp.concatenate([wq.T * scale, wk.T, wv.T], axis=1).astype(bf16)      # (E, 3E)
    bqkv = jnp.concatenate([bq * scale, bk, bv]).reshape(1, 3 * E).astype(f32)

    wo = params["out_proj_w"].T.astype(bf16)                            # (E, E)
    bo = params["out_proj_b"].reshape(1, E).astype(f32)
    w1 = params["ff1_w"].T.astype(bf16)                                 # (E, 2E)
    b1 = params["ff1_b"].reshape(1, 2 * E).astype(f32)
    w2 = params["ff2_w"].T.astype(bf16)                                 # (2E, E)
    b2 = params["ff2_b"].reshape(1, E).astype(f32)
    g1 = params["ln1_g"].reshape(1, E).astype(f32)
    be1 = params["ln1_b"].reshape(1, E).astype(f32)
    g2 = params["ln2_g"].reshape(1, E).astype(f32)
    be2 = params["ln2_b"].reshape(1, E).astype(f32)

    weights = [wqkv, bqkv, wo, bo, w1, b1, w2, b2, g1, be1, g2, be2]

    def invariant(a):
        return pl.BlockSpec(a.shape, lambda b, _n=a.ndim: (0,) * _n)

    x_spec = pl.BlockSpec((1, L, E), lambda b: (b, 0, 0))
    out_spec = pl.BlockSpec((1, L, E), lambda b: (b, 0, 0))
    in_specs = [x_spec] + [invariant(a) for a in weights]

    # VMEM budget derived from the actual per-step blocks (double-buffered) plus headroom,
    # kept well under the 64 MiB / 128 MiB physical ceilings.
    def nbytes(a):
        return math.prod(a.shape) * jnp.dtype(a.dtype).itemsize
    block_bytes = 2 * (L * E * 4) + sum(nbytes(a) for a in weights)     # x block + out block + weights
    vmem_limit = int(max(4 << 20, min(40 << 20, 16 * block_bytes)))

    kernel = functools.partial(_encoder_block_kernel, n_head=H, head_dim=dh, n_embed=E)
    out_nle = pl.pallas_call(
        kernel,
        out_shape=jax.ShapeDtypeStruct((N, L, E), jnp.float32),
        grid=(N,),
        in_specs=in_specs,
        out_specs=out_spec,
        compiler_params=pltpu.CompilerParams(
            dimension_semantics=("parallel",),     # batches are independent -> megacore-shardable
            vmem_limit_bytes=vmem_limit,
        ),
    )(x_nle, *weights)

    return jnp.transpose(out_nle, (1, 0, 2))                            # back to (L, N, E)


def encoder_block_reference(x_lne, params, n_head):
    """Plain-JAX f32 reference matching PyTorch EncoderBlock.forward semantics."""
    L, N, E = x_lne.shape
    dh = E // n_head
    x = jnp.transpose(x_lne, (1, 0, 2)).astype(jnp.float32)             # (B, S, E)

    def ln(y, g, b):
        mu = jnp.mean(y, axis=-1, keepdims=True)
        var = jnp.mean((y - mu) ** 2, axis=-1, keepdims=True)
        return (y - mu) * lax.rsqrt(var + 1e-5) * g + b

    wq, wk, wv = (params["in_proj_w"][i * E:(i + 1) * E] for i in range(3))
    bq, bk, bv = (params["in_proj_b"][i * E:(i + 1) * E] for i in range(3))
    q = x @ wq.T + bq
    k = x @ wk.T + bk
    v = x @ wv.T + bv
    q = q.reshape(N, L, n_head, dh).transpose(0, 2, 1, 3)
    k = k.reshape(N, L, n_head, dh).transpose(0, 2, 1, 3)
    v = v.reshape(N, L, n_head, dh).transpose(0, 2, 1, 3)
    s = jnp.einsum("bhqd,bhkd->bhqk", q, k) / (dh ** 0.5)
    p = jax.nn.softmax(s, axis=-1)
    a = jnp.einsum("bhqk,bhkd->bhqd", p, v).transpose(0, 2, 1, 3).reshape(N, L, E)
    a = a @ params["out_proj_w"].T + params["out_proj_b"]

    x1 = ln(x + a, params["ln1_g"], params["ln1_b"])
    h = jnp.maximum(x1 @ params["ff1_w"].T + params["ff1_b"], 0.0)
    ff = h @ params["ff2_w"].T + params["ff2_b"]
    x2 = ln(x1 + ff, params["ln2_g"], params["ln2_b"])
    return jnp.transpose(x2, (1, 0, 2))


if __name__ == "__main__":
    n_embed, n_head = 32, 4
    seq_len, batch = 8, 2

    key = jax.random.PRNGKey(0)
    ks = jax.random.split(key, 10)
    E = n_embed
    params = {
        "in_proj_w": 0.1 * jax.random.normal(ks[0], (3 * E, E), jnp.float32),
        "in_proj_b": 0.1 * jax.random.normal(ks[1], (3 * E,), jnp.float32),
        "out_proj_w": 0.1 * jax.random.normal(ks[2], (E, E), jnp.float32),
        "out_proj_b": 0.1 * jax.random.normal(ks[3], (E,), jnp.float32),
        "ff1_w": 0.1 * jax.random.normal(ks[4], (2 * E, E), jnp.float32),
        "ff1_b": 0.1 * jax.random.normal(ks[5], (2 * E,), jnp.float32),
        "ff2_w": 0.1 * jax.random.normal(ks[6], (E, 2 * E), jnp.float32),
        "ff2_b": 0.1 * jax.random.normal(ks[7], (E,), jnp.float32),
        "ln1_g": jnp.ones((E,), jnp.float32),
        "ln1_b": jnp.zeros((E,), jnp.float32),
        "ln2_g": jnp.ones((E,), jnp.float32),
        "ln2_b": jnp.zeros((E,), jnp.float32),
    }

    x = jax.random.normal(ks[8], (seq_len, batch, n_embed), jnp.float32)   # (L, N, E)

    out = jax.block_until_ready(encoder_block_pallas(x, params, n_head))
    ref = jax.block_until_ready(encoder_block_reference(x, params, n_head))

    assert out.shape == (seq_len, batch, n_embed)
    max_err = float(jnp.max(jnp.abs(out - ref)))
    # bf16 matmul operands with f32 accumulation + approx reciprocal -> ~1e-2 scale vs f32 ref.
    assert jnp.allclose(out, ref, atol=3e-2, rtol=3e-2), max_err
    print("KERNEL_OK")
</pallas_src>

<mosaic_0001>
module attributes {stable_mosaic.version = 11 : i64} {
  func.func @_encoder_block_kernel(%arg0: i32, %arg1: memref<1x8x32xf32, #tpu.memory_space<vmem>>, %arg2: memref<32x96xbf16, #tpu.memory_space<vmem>>, %arg3: memref<1x96xf32, #tpu.memory_space<vmem>>, %arg4: memref<32x32xbf16, #tpu.memory_space<vmem>>, %arg5: memref<1x32xf32, #tpu.memory_space<vmem>>, %arg6: memref<32x64xbf16, #tpu.memory_space<vmem>>, %arg7: memref<1x64xf32, #tpu.memory_space<vmem>>, %arg8: memref<64x32xbf16, #tpu.memory_space<vmem>>, %arg9: memref<1x32xf32, #tpu.memory_space<vmem>>, %arg10: memref<1x32xf32, #tpu.memory_space<vmem>>, %arg11: memref<1x32xf32, #tpu.memory_space<vmem>>, %arg12: memref<1x32xf32, #tpu.memory_space<vmem>>, %arg13: memref<1x32xf32, #tpu.memory_space<vmem>>, %arg14: memref<1x8x32xf32, #tpu.memory_space<vmem>>) attributes {dimension_semantics = [#tpu.dimension_semantics<parallel>], iteration_bounds = array<i64: 2>, scalar_prefetch = 0 : i64, scratch_operands = 0 : i64, tpu.core_type = #tpu.core_type<tc>, window_params = [{transform_indices = @transform_0, window_bounds = array<i64: 1, 8, 32>}, {pipeline_mode = #tpu.pipeline_mode<synchronous>, transform_indices = @transform_1, window_bounds = array<i64: 32, 96>}, {pipeline_mode = #tpu.pipeline_mode<synchronous>, transform_indices = @transform_2, window_bounds = array<i64: 1, 96>}, {pipeline_mode = #tpu.pipeline_mode<synchronous>, transform_indices = @transform_3, window_bounds = array<i64: 32, 32>}, {pipeline_mode = #tpu.pipeline_mode<synchronous>, transform_indices = @transform_4, window_bounds = array<i64: 1, 32>}, {pipeline_mode = #tpu.pipeline_mode<synchronous>, transform_indices = @transform_5, window_bounds = array<i64: 32, 64>}, {pipeline_mode = #tpu.pipeline_mode<synchronous>, transform_indices = @transform_6, window_bounds = array<i64: 1, 64>}, {pipeline_mode = #tpu.pipeline_mode<synchronous>, transform_indices = @transform_7, window_bounds = array<i64: 64, 32>}, {pipeline_mode = #tpu.pipeline_mode<synchronous>, transform_indices = @transform_8, window_bounds = array<i64: 1, 32>}, {pipeline_mode = #tpu.pipeline_mode<synchronous>, transform_indices = @transform_9, window_bounds = array<i64: 1, 32>}, {pipeline_mode = #tpu.pipeline_mode<synchronous>, transform_indices = @transform_10, window_bounds = array<i64: 1, 32>}, {pipeline_mode = #tpu.pipeline_mode<synchronous>, transform_indices = @transform_11, window_bounds = array<i64: 1, 32>}, {pipeline_mode = #tpu.pipeline_mode<synchronous>, transform_indices = @transform_12, window_bounds = array<i64: 1, 32>}, {transform_indices = @transform_13, window_bounds = array<i64: 1, 8, 32>}]} {
    %c0 = arith.constant 0 : index
    %c0_0 = arith.constant 0 : index
    %c0_1 = arith.constant 0 : index
    %0 = vector.load %arg1[%c0, %c0_0, %c0_1] : memref<1x8x32xf32, #tpu.memory_space<vmem>>, vector<1x8x32xf32>
    %1 = vector.shape_cast %0 : vector<1x8x32xf32> to vector<8x32xf32>
    %2 = arith.truncf %1 : vector<8x32xf32> to vector<8x32xbf16>
    %c0_2 = arith.constant 0 : index
    %c0_3 = arith.constant 0 : index
    %3 = vector.load %arg2[%c0_2, %c0_3] : memref<32x96xbf16, #tpu.memory_space<vmem>>, vector<32x96xbf16>
    %cst = arith.constant dense<0.000000e+00> : vector<8x96xf32>
    %4 = tpu.matmul %2, %3, %cst {dimension_numbers = #tpu.dot_dimension_numbers<[1], [0], [0], [1], [0, 0, 1, 1], [], []>} : vector<8x32xbf16>, vector<32x96xbf16>, vector<8x96xf32> -> vector<8x96xf32>
    %c0_4 = arith.constant 0 : index
    %c0_5 = arith.constant 0 : index
    %5 = vector.load %arg3[%c0_4, %c0_5] : memref<1x96xf32, #tpu.memory_space<vmem>>, vector<1x96xf32>
    %6 = vector.broadcast %5 : vector<1x96xf32> to vector<8x96xf32>
    %7 = arith.addf %4, %6 : vector<8x96xf32>
    %8 = arith.truncf %7 : vector<8x96xf32> to vector<8x96xbf16>
    %9 = vector.extract_strided_slice %8 {offsets = [0, 0], sizes = [8, 8], strides = [1, 1]} : vector<8x96xbf16> to vector<8x8xbf16>
    %10 = vector.extract_strided_slice %8 {offsets = [0, 32], sizes = [8, 8], strides = [1, 1]} : vector<8x96xbf16> to vector<8x8xbf16>
    %11 = vector.extract_strided_slice %8 {offsets = [0, 64], sizes = [8, 8], strides = [1, 1]} : vector<8x96xbf16> to vector<8x8xbf16>
    "tpu.trace_start"() <{level = 10 : i32, message = "qd,kd->qk"}> : () -> ()
    %cst_6 = arith.constant dense<0.000000e+00> : vector<8x8xf32>
    %12 = tpu.matmul %9, %10, %cst_6 {dimension_numbers = #tpu.dot_dimension_numbers<[1], [1], [0], [0], [0, 0, 1, 0], [], []>} : vector<8x8xbf16>, vector<8x8xbf16>, vector<8x8xf32> -> vector<8x8xf32>
    "tpu.trace_stop"() : () -> ()
    %cst_7 = arith.constant dense<0xFF800000> : vector<8xf32>
    %13 = vector.multi_reduction <maximumf>, %12, %cst_7 [1] : vector<8x8xf32> to vector<8xf32>
    %14 = vector.shape_cast %13 : vector<8xf32> to vector<8x1xf32>
    %15 = vector.broadcast %14 : vector<8x1xf32> to vector<8x8xf32>
    %16 = arith.subf %12, %15 : vector<8x8xf32>
    %17 = math.exp %16 : vector<8x8xf32>
    %cst_8 = arith.constant dense<0.000000e+00> : vector<8xf32>
    %18 = vector.multi_reduction <add>, %17, %cst_8 [1] : vector<8x8xf32> to vector<8xf32>
    %19 = vector.shape_cast %18 : vector<8xf32> to vector<8x1xf32>
    %20 = arith.truncf %17 : vector<8x8xf32> to vector<8x8xbf16>
    %cst_9 = arith.constant dense<0.000000e+00> : vector<8x8xf32>
    %21 = tpu.matmul %20, %11, %cst_9 {dimension_numbers = #tpu.dot_dimension_numbers<[1], [0], [0], [1], [0, 0, 1, 1], [], []>} : vector<8x8xbf16>, vector<8x8xbf16>, vector<8x8xf32> -> vector<8x8xf32>
    %22 = tpu.reciprocal %19 {approx = true} : vector<8x1xf32> -> vector<8x1xf32>
    %23 = vector.broadcast %22 : vector<8x1xf32> to vector<8x8xf32>
    %24 = arith.mulf %21, %23 : vector<8x8xf32>
    %25 = vector.extract_strided_slice %8 {offsets = [0, 8], sizes = [8, 8], strides = [1, 1]} : vector<8x96xbf16> to vector<8x8xbf16>
    %26 = vector.extract_strided_slice %8 {offsets = [0, 40], sizes = [8, 8], strides = [1, 1]} : vector<8x96xbf16> to vector<8x8xbf16>
    %27 = vector.extract_strided_slice %8 {offsets = [0, 72], sizes = [8, 8], strides = [1, 1]} : vector<8x96xbf16> to vector<8x8xbf16>
    "tpu.trace_start"() <{level = 10 : i32, message = "qd,kd->qk"}> : () -> ()
    %cst_10 = arith.constant dense<0.000000e+00> : vector<8x8xf32>
    %28 = tpu.matmul %25, %26, %cst_10 {dimension_numbers = #tpu.dot_dimension_numbers<[1], [1], [0], [0], [0, 0, 1, 0], [], []>} : vector<8x8xbf16>, vector<8x8xbf16>, vector<8x8xf32> -> vector<8x8xf32>
    "tpu.trace_stop"() : () -> ()
    %cst_11 = arith.constant dense<0xFF800000> : vector<8xf32>
    %29 = vector.multi_reduction <maximumf>, %28, %cst_11 [1] : vector<8x8xf32> to vector<8xf32>
    %30 = vector.shape_cast %29 : vector<8xf32> to vector<8x1xf32>
    %31 = vector.broadcast %30 : vector<8x1xf32> to vector<8x8xf32>
    %32 = arith.subf %28, %31 : vector<8x8xf32>
    %33 = math.exp %32 : vector<8x8xf32>
    %cst_12 = arith.constant dense<0.000000e+00> : vector<8xf32>
    %34 = vector.multi_reduction <add>, %33, %cst_12 [1] : vector<8x8xf32> to vector<8xf32>
    %35 = vector.shape_cast %34 : vector<8xf32> to vector<8x1xf32>
    %36 = arith.truncf %33 : vector<8x8xf32> to vector<8x8xbf16>
    %cst_13 = arith.constant dense<0.000000e+00> : vector<8x8xf32>
    %37 = tpu.matmul %36, %27, %cst_13 {dimension_numbers = #tpu.dot_dimension_numbers<[1], [0], [0], [1], [0, 0, 1, 1], [], []>} : vector<8x8xbf16>, vector<8x8xbf16>, vector<8x8xf32> -> vector<8x8xf32>
    %38 = tpu.reciprocal %35 {approx = true} : vector<8x1xf32> -> vector<8x1xf32>
    %39 = vector.broadcast %38 : vector<8x1xf32> to vector<8x8xf32>
    %40 = arith.mulf %37, %39 : vector<8x8xf32>
    %41 = vector.extract_strided_slice %8 {offsets = [0, 16], sizes = [8, 8], strides = [1, 1]} : vector<8x96xbf16> to vector<8x8xbf16>
    %42 = vector.extract_strided_slice %8 {offsets = [0, 48], sizes = [8, 8], strides = [1, 1]} : vector<8x96xbf16> to vector<8x8xbf16>
    %43 = vector.extract_strided_slice %8 {offsets = [0, 80], sizes = [8, 8], strides = [1, 1]} : vector<8x96xbf16> to vector<8x8xbf16>
    "tpu.trace_start"() <{level = 10 : i32, message = "qd,kd->qk"}> : () -> ()
    %cst_14 = arith.constant dense<0.000000e+00> : vector<8x8xf32>
    %44 = tpu.matmul %41, %42, %cst_14 {dimension_numbers = #tpu.dot_dimension_numbers<[1], [1], [0], [0], [0, 0, 1, 0], [], []>} : vector<8x8xbf16>, vector<8x8xbf16>, vector<8x8xf32> -> vector<8x8xf32>
    "tpu.trace_stop"() : () -> ()
    %cst_15 = arith.constant dense<0xFF800000> : vector<8xf32>
    %45 = vector.multi_reduction <maximumf>, %44, %cst_15 [1] : vector<8x8xf32> to vector<8xf32>
    %46 = vector.shape_cast %45 : vector<8xf32> to vector<8x1xf32>
    %47 = vector.broadcast %46 : vector<8x1xf32> to vector<8x8xf32>
    %48 = arith.subf %44, %47 : vector<8x8xf32>
    %49 = math.exp %48 : vector<8x8xf32>
    %cst_16 = arith.constant dense<0.000000e+00> : vector<8xf32>
    %50 = vector.multi_reduction <add>, %49, %cst_16 [1] : vector<8x8xf32> to vector<8xf32>
    %51 = vector.shape_cast %50 : vector<8xf32> to vector<8x1xf32>
    %52 = arith.truncf %49 : vector<8x8xf32> to vector<8x8xbf16>
    %cst_17 = arith.constant dense<0.000000e+00> : vector<8x8xf32>
    %53 = tpu.matmul %52, %43, %cst_17 {dimension_numbers = #tpu.dot_dimension_numbers<[1], [0], [0], [1], [0, 0, 1, 1], [], []>} : vector<8x8xbf16>, vector<8x8xbf16>, vector<8x8xf32> -> vector<8x8xf32>
    %54 = tpu.reciprocal %51 {approx = true} : vector<8x1xf32> -> vector<8x1xf32>
    %55 = vector.broadcast %54 : vector<8x1xf32> to vector<8x8xf32>
    %56 = arith.mulf %53, %55 : vector<8x8xf32>
    %57 = vector.extract_strided_slice %8 {offsets = [0, 24], sizes = [8, 8], strides = [1, 1]} : vector<8x96xbf16> to vector<8x8xbf16>
    %58 = vector.extract_strided_slice %8 {offsets = [0, 56], sizes = [8, 8], strides = [1, 1]} : vector<8x96xbf16> to vector<8x8xbf16>
    %59 = vector.extract_strided_slice %8 {offsets = [0, 88], sizes = [8, 8], strides = [1, 1]} : vector<8x96xbf16> to vector<8x8xbf16>
    "tpu.trace_start"() <{level = 10 : i32, message = "qd,kd->qk"}> : () -> ()
    %cst_18 = arith.constant dense<0.000000e+00> : vector<8x8xf32>
    %60 = tpu.matmul %57, %58, %cst_18 {dimension_numbers = #tpu.dot_dimension_numbers<[1], [1], [0], [0], [0, 0, 1, 0], [], []>} : vector<8x8xbf16>, vector<8x8xbf16>, vector<8x8xf32> -> vector<8x8xf32>
    "tpu.trace_stop"() : () -> ()
    %cst_19 = arith.constant dense<0xFF800000> : vector<8xf32>
    %61 = vector.multi_reduction <maximumf>, %60, %cst_19 [1] : vector<8x8xf32> to vector<8xf32>
    %62 = vector.shape_cast %61 : vector<8xf32> to vector<8x1xf32>
    %63 = vector.broadcast %62 : vector<8x1xf32> to vector<8x8xf32>
    %64 = arith.subf %60, %63 : vector<8x8xf32>
    %65 = math.exp %64 : vector<8x8xf32>
    %cst_20 = arith.constant dense<0.000000e+00> : vector<8xf32>
    %66 = vector.multi_reduction <add>, %65, %cst_20 [1] : vector<8x8xf32> to vector<8xf32>
    %67 = vector.shape_cast %66 : vector<8xf32> to vector<8x1xf32>
    %68 = arith.truncf %65 : vector<8x8xf32> to vector<8x8xbf16>
    %cst_21 = arith.constant dense<0.000000e+00> : vector<8x8xf32>
    %69 = tpu.matmul %68, %59, %cst_21 {dimension_numbers = #tpu.dot_dimension_numbers<[1], [0], [0], [1], [0, 0, 1, 1], [], []>} : vector<8x8xbf16>, vector<8x8xbf16>, vector<8x8xf32> -> vector<8x8xf32>
    %70 = tpu.reciprocal %67 {approx = true} : vector<8x1xf32> -> vector<8x1xf32>
    %71 = vector.broadcast %70 : vector<8x1xf32> to vector<8x8xf32>
    %72 = arith.mulf %69, %71 : vector<8x8xf32>
    %73 = tpu.concatenate %24, %40, %56, %72 in 1 : vector<8x8xf32>, vector<8x8xf32>, vector<8x8xf32>, vector<8x8xf32> -> vector<8x32xf32>
    %74 = arith.truncf %73 : vector<8x32xf32> to vector<8x32xbf16>
    %c0_22 = arith.constant 0 : index
    %c0_23 = arith.constant 0 : index
    %75 = vector.load %arg4[%c0_22, %c0_23] : memref<32x32xbf16, #tpu.memory_space<vmem>>, vector<32x32xbf16>
    %cst_24 = arith.constant dense<0.000000e+00> : vector<8x32xf32>
    %76 = tpu.matmul %74, %75, %cst_24 {dimension_numbers = #tpu.dot_dimension_numbers<[1], [0], [0], [1], [0, 0, 1, 1], [], []>} : vector<8x32xbf16>, vector<32x32xbf16>, vector<8x32xf32> -> vector<8x32xf32>
    %c0_25 = arith.constant 0 : index
    %c0_26 = arith.constant 0 : index
    %77 = vector.load %arg5[%c0_25, %c0_26] : memref<1x32xf32, #tpu.memory_space<vmem>>, vector<1x32xf32>
    %78 = vector.broadcast %77 : vector<1x32xf32> to vector<8x32xf32>
    %79 = arith.addf %76, %78 : vector<8x32xf32>
    %80 = arith.addf %1, %79 : vector<8x32xf32>
    %cst_27 = arith.constant dense<0.000000e+00> : vector<8xf32>
    %81 = vector.multi_reduction <add>, %80, %cst_27 [1] : vector<8x32xf32> to vector<8xf32>
    %82 = vector.shape_cast %81 : vector<8xf32> to vector<8x1xf32>
    %cst_28 = arith.constant 3.200000e+01 : f32
    %83 = vector.broadcast %cst_28 : f32 to vector<8x1xf32>
    %84 = arith.divf %82, %83 : vector<8x1xf32>
    %85 = vector.broadcast %84 : vector<8x1xf32> to vector<8x32xf32>
    %86 = arith.subf %80, %85 : vector<8x32xf32>
    %87 = arith.mulf %86, %86 : vector<8x32xf32>
    %cst_29 = arith.constant dense<0.000000e+00> : vector<8xf32>
    %88 = vector.multi_reduction <add>, %87, %cst_29 [1] : vector<8x32xf32> to vector<8xf32>
    %89 = vector.shape_cast %88 : vector<8xf32> to vector<8x1xf32>
    %cst_30 = arith.constant 3.200000e+01 : f32
    %90 = vector.broadcast %cst_30 : f32 to vector<8x1xf32>
    %91 = arith.divf %89, %90 : vector<8x1xf32>
    %cst_31 = arith.constant 9.99999974E-6 : f32
    %92 = vector.broadcast %cst_31 : f32 to vector<8x1xf32>
    %93 = arith.addf %91, %92 : vector<8x1xf32>
    %94 = math.rsqrt %93 : vector<8x1xf32>
    %95 = vector.broadcast %94 : vector<8x1xf32> to vector<8x32xf32>
    %96 = arith.mulf %86, %95 : vector<8x32xf32>
    %c0_32 = arith.constant 0 : index
    %c0_33 = arith.constant 0 : index
    %97 = vector.load %arg10[%c0_32, %c0_33] : memref<1x32xf32, #tpu.memory_space<vmem>>, vector<1x32xf32>
    %98 = vector.broadcast %97 : vector<1x32xf32> to vector<8x32xf32>
    %99 = arith.mulf %96, %98 : vector<8x32xf32>
    %c0_34 = arith.constant 0 : index
    %c0_35 = arith.constant 0 : index
    %100 = vector.load %arg11[%c0_34, %c0_35] : memref<1x32xf32, #tpu.memory_space<vmem>>, vector<1x32xf32>
    %101 = vector.broadcast %100 : vector<1x32xf32> to vector<8x32xf32>
    %102 = arith.addf %99, %101 : vector<8x32xf32>
    %103 = arith.truncf %102 : vector<8x32xf32> to vector<8x32xbf16>
    %c0_36 = arith.constant 0 : index
    %c0_37 = arith.constant 0 : index
    %104 = vector.load %arg6[%c0_36, %c0_37] : memref<32x64xbf16, #tpu.memory_space<vmem>>, vector<32x64xbf16>
    %cst_38 = arith.constant dense<0.000000e+00> : vector<8x64xf32>
    %105 = tpu.matmul %103, %104, %cst_38 {dimension_numbers = #tpu.dot_dimension_numbers<[1], [0], [0], [1], [0, 0, 1, 1], [], []>} : vector<8x32xbf16>, vector<32x64xbf16>, vector<8x64xf32> -> vector<8x64xf32>
    %c0_39 = arith.constant 0 : index
    %c0_40 = arith.constant 0 : index
    %106 = vector.load %arg7[%c0_39, %c0_40] : memref<1x64xf32, #tpu.memory_space<vmem>>, vector<1x64xf32>
    %107 = vector.broadcast %106 : vector<1x64xf32> to vector<8x64xf32>
    %108 = arith.addf %105, %107 : vector<8x64xf32>
    %cst_41 = arith.constant 0.000000e+00 : f32
    %109 = vector.broadcast %cst_41 : f32 to vector<8x64xf32>
    %110 = arith.maximumf %108, %109 : vector<8x64xf32>
    %111 = arith.truncf %110 : vector<8x64xf32> to vector<8x64xbf16>
    %c0_42 = arith.constant 0 : index
    %c0_43 = arith.constant 0 : index
    %112 = vector.load %arg8[%c0_42, %c0_43] : memref<64x32xbf16, #tpu.memory_space<vmem>>, vector<64x32xbf16>
    %cst_44 = arith.constant dense<0.000000e+00> : vector<8x32xf32>
    %113 = tpu.matmul %111, %112, %cst_44 {dimension_numbers = #tpu.dot_dimension_numbers<[1], [0], [0], [1], [0, 0, 1, 1], [], []>} : vector<8x64xbf16>, vector<64x32xbf16>, vector<8x32xf32> -> vector<8x32xf32>
    %c0_45 = arith.constant 0 : index
    %c0_46 = arith.constant 0 : index
    %114 = vector.load %arg9[%c0_45, %c0_46] : memref<1x32xf32, #tpu.memory_space<vmem>>, vector<1x32xf32>
    %115 = vector.broadcast %114 : vector<1x32xf32> to vector<8x32xf32>
    %116 = arith.addf %113, %115 : vector<8x32xf32>
    %117 = arith.addf %102, %116 : vector<8x32xf32>
    %cst_47 = arith.constant dense<0.000000e+00> : vector<8xf32>
    %118 = vector.multi_reduction <add>, %117, %cst_47 [1] : vector<8x32xf32> to vector<8xf32>
    %119 = vector.shape_cast %118 : vector<8xf32> to vector<8x1xf32>
    %cst_48 = arith.constant 3.200000e+01 : f32
    %120 = vector.broadcast %cst_48 : f32 to vector<8x1xf32>
    %121 = arith.divf %119, %120 : vector<8x1xf32>
    %122 = vector.broadcast %121 : vector<8x1xf32> to vector<8x32xf32>
    %123 = arith.subf %117, %122 : vector<8x32xf32>
    %124 = arith.mulf %123, %123 : vector<8x32xf32>
    %cst_49 = arith.constant dense<0.000000e+00> : vector<8xf32>
    %125 = vector.multi_reduction <add>, %124, %cst_49 [1] : vector<8x32xf32> to vector<8xf32>
    %126 = vector.shape_cast %125 : vector<8xf32> to vector<8x1xf32>
    %cst_50 = arith.constant 3.200000e+01 : f32
    %127 = vector.broadcast %cst_50 : f32 to vector<8x1xf32>
    %128 = arith.divf %126, %127 : vector<8x1xf32>
    %cst_51 = arith.constant 9.99999974E-6 : f32
    %129 = vector.broadcast %cst_51 : f32 to vector<8x1xf32>
    %130 = arith.addf %128, %129 : vector<8x1xf32>
    %131 = math.rsqrt %130 : vector<8x1xf32>
    %132 = vector.broadcast %131 : vector<8x1xf32> to vector<8x32xf32>
    %133 = arith.mulf %123, %132 : vector<8x32xf32>
    %c0_52 = arith.constant 0 : index
    %c0_53 = arith.constant 0 : index
    %134 = vector.load %arg12[%c0_52, %c0_53] : memref<1x32xf32, #tpu.memory_space<vmem>>, vector<1x32xf32>
    %135 = vector.broadcast %134 : vector<1x32xf32> to vector<8x32xf32>
    %136 = arith.mulf %133, %135 : vector<8x32xf32>
    %c0_54 = arith.constant 0 : index
    %c0_55 = arith.constant 0 : index
    %137 = vector.load %arg13[%c0_54, %c0_55] : memref<1x32xf32, #tpu.memory_space<vmem>>, vector<1x32xf32>
    %138 = vector.broadcast %137 : vector<1x32xf32> to vector<8x32xf32>
    %139 = arith.addf %136, %138 : vector<8x32xf32>
    %c0_56 = arith.constant 0 : index
    %c0_57 = arith.constant 0 : index
    %c0_58 = arith.constant 0 : index
    %140 = vector.load %arg14[%c0_56, %c0_57, %c0_58] : memref<1x8x32xf32, #tpu.memory_space<vmem>>, vector<1x8x32xf32>
    %141 = vector.shape_cast %140 : vector<1x8x32xf32> to vector<8x32xf32>
    %142 = vector.shape_cast %139 : vector<8x32xf32> to vector<1x8x32xf32>
    tpu.vector_store %arg14[%c0_56, %c0_57, %c0_58], %142 {strides = array<i32>} : memref<1x8x32xf32, #tpu.memory_space<vmem>>, vector<1x8x32xf32>,
    return
  }
  func.func @transform_0(%arg0: i32) -> (i32, i32, i32) {
    %c0_i32 = arith.constant 0 : i32
    %c0_i32_0 = arith.constant 0 : i32
    %c0_i32_1 = arith.constant 0 : i32
    return %arg0, %c0_i32, %c0_i32_0 : i32, i32, i32
  }
  func.func @transform_1(%arg0: i32) -> (i32, i32) {
    %c0_i32 = arith.constant 0 : i32
    %c0_i32_0 = arith.constant 0 : i32
    %c0_i32_1 = arith.constant 0 : i32
    return %c0_i32, %c0_i32_0 : i32, i32
  }
  func.func @transform_2(%arg0: i32) -> (i32, i32) {
    %c0_i32 = arith.constant 0 : i32
    %c0_i32_0 = arith.constant 0 : i32
    %c0_i32_1 = arith.constant 0 : i32
    return %c0_i32, %c0_i32_0 : i32, i32
  }
  func.func @transform_3(%arg0: i32) -> (i32, i32) {
    %c0_i32 = arith.constant 0 : i32
    %c0_i32_0 = arith.constant 0 : i32
    %c0_i32_1 = arith.constant 0 : i32
    return %c0_i32, %c0_i32_0 : i32, i32
  }
  func.func @transform_4(%arg0: i32) -> (i32, i32) {
    %c0_i32 = arith.constant 0 : i32
    %c0_i32_0 = arith.constant 0 : i32
    %c0_i32_1 = arith.constant 0 : i32
    return %c0_i32, %c0_i32_0 : i32, i32
  }
  func.func @transform_5(%arg0: i32) -> (i32, i32) {
    %c0_i32 = arith.constant 0 : i32
    %c0_i32_0 = arith.constant 0 : i32
    %c0_i32_1 = arith.constant 0 : i32
    return %c0_i32, %c0_i32_0 : i32, i32
  }
  func.func @transform_6(%arg0: i32) -> (i32, i32) {
    %c0_i32 = arith.constant 0 : i32
    %c0_i32_0 = arith.constant 0 : i32
    %c0_i32_1 = arith.constant 0 : i32
    return %c0_i32, %c0_i32_0 : i32, i32
  }
  func.func @transform_7(%arg0: i32) -> (i32, i32) {
    %c0_i32 = arith.constant 0 : i32
    %c0_i32_0 = arith.constant 0 : i32
    %c0_i32_1 = arith.constant 0 : i32
    return %c0_i32, %c0_i32_0 : i32, i32
  }
  func.func @transform_8(%arg0: i32) -> (i32, i32) {
    %c0_i32 = arith.constant 0 : i32
    %c0_i32_0 = arith.constant 0 : i32
    %c0_i32_1 = arith.constant 0 : i32
    return %c0_i32, %c0_i32_0 : i32, i32
  }
  func.func @transform_9(%arg0: i32) -> (i32, i32) {
    %c0_i32 = arith.constant 0 : i32
    %c0_i32_0 = arith.constant 0 : i32
    %c0_i32_1 = arith.constant 0 : i32
    return %c0_i32, %c0_i32_0 : i32, i32
  }
  func.func @transform_10(%arg0: i32) -> (i32, i32) {
    %c0_i32 = arith.constant 0 : i32
    %c0_i32_0 = arith.constant 0 : i32
    %c0_i32_1 = arith.constant 0 : i32
    return %c0_i32, %c0_i32_0 : i32, i32
  }
  func.func @transform_11(%arg0: i32) -> (i32, i32) {
    %c0_i32 = arith.constant 0 : i32
    %c0_i32_0 = arith.constant 0 : i32
    %c0_i32_1 = arith.constant 0 : i32
    return %c0_i32, %c0_i32_0 : i32, i32
  }
  func.func @transform_12(%arg0: i32) -> (i32, i32) {
    %c0_i32 = arith.constant 0 : i32
    %c0_i32_0 = arith.constant 0 : i32
    %c0_i32_1 = arith.constant 0 : i32
    return %c0_i32, %c0_i32_0 : i32, i32
  }
  func.func @transform_13(%arg0: i32) -> (i32, i32, i32) {
    %c0_i32 = arith.constant 0 : i32
    %c0_i32_0 = arith.constant 0 : i32
    %c0_i32_1 = arith.constant 0 : i32
    return %arg0, %c0_i32, %c0_i32_0 : i32, i32, i32
  }
}

</mosaic_0001>

<llo_original>
// kernel: tpu_custom_call.1
$region0: #{tpu_custom_call.1}
  #allocation0 [shape = 'u32[]', space=smem, size = 0x4, offset = 0x4, fixed_abs, tag = 'smem constant byte address 0x4 - core index']
  #allocation1 [shape = 'u32[72,128]{1,0:T(1,128)}', space=vmem, size = 0x9000, scoped, tag = 'internal scratch']
  %s0 = inlined_call_operand.vmem [shape: f32[2,8,32], index: 0, kind: input, shape index: {}]
  %s1 = inlined_call_operand.vmem [shape: bf16[32,96], index: 1, kind: input, shape index: {}]
  %s2 = inlined_call_operand.vmem [shape: f32[1,96], index: 2, kind: input, shape index: {}]
  %s3 = inlined_call_operand.vmem [shape: bf16[32,32], index: 3, kind: input, shape index: {}]
  %s4 = inlined_call_operand.vmem [shape: f32[1,32], index: 4, kind: input, shape index: {}]
  %s5 = inlined_call_operand.hbm [shape: bf16[32,64], index: 5, kind: input, shape index: {}]
  %s6 = inlined_call_operand.vmem [shape: f32[1,64], index: 6, kind: input, shape index: {}]
  %s7 = inlined_call_operand.vmem [shape: bf16[64,32], index: 7, kind: input, shape index: {}]
  %s8 = inlined_call_operand.vmem [shape: f32[1,32], index: 8, kind: input, shape index: {}]
  %s9 = inlined_call_operand.vmem [shape: f32[1,32], index: 9, kind: input, shape index: {}]
  %s10 = inlined_call_operand.vmem [shape: f32[1,32], index: 10, kind: input, shape index: {}]
  %s11 = inlined_call_operand.vmem [shape: f32[1,32], index: 11, kind: input, shape index: {}]
  %s12 = inlined_call_operand.vmem [shape: f32[1,32], index: 12, kind: input, shape index: {}]
  %s13 = inlined_call_operand.hbm [shape: f32[2,8,32], index: 13, kind: output, shape index: {}]
  %s14 = sld [smem:[#allocation0]]
  $region89: #{tpu_custom_call.1} parent=0
    _
  %s16 = ssub.s32 1, %s14
  %s17 = scalar_select 0, %s16, %s14
  $region1: #{tpu_custom_call.1} parent=0
    #allocation2 [shape = 'u8[8192]{0}', space=vmem, size = 0x2000, scoped, tag = 'input window, operand 5, single buffered']
    #allocation3 [shape = 's32[2]{0}', space=sflag, size = 0x8, scoped, tag = 'scoped memory for tpu_custom_call.1']
    #allocation4 [shape = 's32[2]{0}', space=sflag, size = 0x8, scoped, tag = 'scoped memory for tpu_custom_call.1']
    #allocation5 [shape = 'u8[8192]{0}', space=vmem, size = 0x2000, scoped, tag = 'output window, operand 0']
    %18 = vsyncpa [#allocation3], 0
    %19 = vsyncpa [#allocation4], 0
    %s20 = scalar_lea.sflag [#allocation4], 1
    %21 = vsyncpa %s20, 0
    loop: start=0, step=1, limit=4
    $region2: #{tpu_custom_call.1} parent=1 // loop_pre_header
      _
    $region3: #{tpu_custom_call.1} parent=1 // loop_header
      %s23 = sphi 0, %s27
      %p24 = scmp.ge.s32.totalorder %s23, 4
      %s33 = sphi 0, %s35
      %s36 = sphi 0, %s33
      %s37 = sphi 0, %s36
      %s53 = sphi 0, %s37
      %s57 = sphi 0, %s57
      %s59 = sphi 0, %s57
      %s60 = sphi 0, %s59
      %s74 = sphi 0, %s60
      %s78 = sphi 0, %s78
      %s80 = sphi 0, %s78
      %s81 = sphi 0, %s80
      %s95 = sphi 0, %s81
      %s99 = sphi 0, %s99
      %s101 = sphi 0, %s99
      %s102 = sphi 0, %s101
      %s116 = sphi 0, %s102
      %s120 = sphi 0, %s120
      %s122 = sphi 0, %s120
      %s123 = sphi 0, %s122
      %s137 = sphi 0, %s123
      %s141 = sphi 0, %s141
      %s143 = sphi 0, %s141
      %s144 = sphi 0, %s143
      %s158 = sphi 0, %s144
      %s162 = sphi 0, %s162
      %s164 = sphi 0, %s162
      %s165 = sphi 0, %s164
      %s179 = sphi 0, %s165
      %s183 = sphi 0, %s183
      %s185 = sphi 0, %s183
      %s186 = sphi 0, %s185
      %s200 = sphi 0, %s186
      %s204 = sphi 0, %s204
      %s206 = sphi 0, %s204
      %s207 = sphi 0, %s206
      %s221 = sphi 0, %s207
      %s225 = sphi 0, %s225
      %s227 = sphi 0, %s225
      %s228 = sphi 0, %s227
      %s242 = sphi 0, %s228
      %s246 = sphi 0, %s246
      %s248 = sphi 0, %s246
      %s249 = sphi 0, %s248
      %s263 = sphi 0, %s249
      %s267 = sphi 0, %s267
      %s269 = sphi 0, %s267
      %s270 = sphi 0, %s269
      %s284 = sphi 0, %s270
      %s288 = sphi 0, %s288
      %s290 = sphi 0, %s288
      %s291 = sphi 0, %s290
      %s305 = sphi 0, %s291
      %s311 = sphi 0, %s313
      %s314 = sphi 0, %s311
      %s315 = sphi 0, %s314
      %s331 = sphi 0, %s315
    $region4: #{tpu_custom_call.1} parent=1 // loop_header_branch
      %26 = sbr.rel (%p24) target = $region8
    $region5: #{tpu_custom_call.1} parent=1 // loop_body
      %s28 = ssub.s32 %s23, 1
      %s29 = ssub.s32 %s23, 2
      %s30 = sadd.s32 %s23, 1
      %s31 = ssub.s32 %s23, %s30
      %p32 = scmp.eq.s32.totalorder %s31, 0
      %s34 = sadd.s32 %s33, 1
      %s35 = scalar_select %p32, %s33, %s34
      %p38 = pneg %p32
      %p39 = scmp.eq.s32.totalorder %s23, 1
      %p40 = por %p38, %p39
      %p41 = scmp.ne.s32.totalorder %s33, %s36
      %p42 = scmp.eq.s32.totalorder %s23, 0
      %p43 = por %p41, %p42
      %p44 = scmp.ne.s32.totalorder %s33, %s36
      %p45 = scmp.eq.s32.totalorder %s28, 1
      %p46 = por %p44, %p45
      %p47 = scmp.ne.s32.totalorder %s36, %s37
      %p48 = scmp.eq.s32.totalorder %s28, 0
      %p49 = por %p47, %p48
      %p50 = scmp.ne.s32.totalorder %s36, %s37
      %p51 = scmp.eq.s32.totalorder %s29, 1
      %p52 = por %p50, %p51
      %p54 = scmp.ne.s32.totalorder %s37, %s53
      %p55 = scmp.eq.s32.totalorder %s29, 0
      %p56 = por %p54, %p55
      %s58 = sadd.s32 %s57, 1
      %p61 = scmp.eq.s32.totalorder %s23, 1
      %p62 = scmp.ne.s32.totalorder %s57, %s59
      %p63 = scmp.eq.s32.totalorder %s23, 0
      %p64 = por %p62, %p63
      %p65 = scmp.ne.s32.totalorder %s57, %s59
      %p66 = scmp.eq.s32.totalorder %s28, 1
      %p67 = por %p65, %p66
      %p68 = scmp.ne.s32.totalorder %s59, %s60
      %p69 = scmp.eq.s32.totalorder %s28, 0
      %p70 = por %p68, %p69
      %p71 = scmp.ne.s32.totalorder %s59, %s60
      %p72 = scmp.eq.s32.totalorder %s29, 1
      %p73 = por %p71, %p72
      %p75 = scmp.ne.s32.totalorder %s60, %s74
      %p76 = scmp.eq.s32.totalorder %s29, 0
      %p77 = por %p75, %p76
      %s79 = sadd.s32 %s78, 1
      %p82 = scmp.eq.s32.totalorder %s23, 1
      %p83 = scmp.ne.s32.totalorder %s78, %s80
      %p84 = scmp.eq.s32.totalorder %s23, 0
      %p85 = por %p83, %p84
      %p86 = scmp.ne.s32.totalorder %s78, %s80
      %p87 = scmp.eq.s32.totalorder %s28, 1
      %p88 = por %p86, %p87
      %p89 = scmp.ne.s32.totalorder %s80, %s81
      %p90 = scmp.eq.s32.totalorder %s28, 0
      %p91 = por %p89, %p90
      %p92 = scmp.ne.s32.totalorder %s80, %s81
      %p93 = scmp.eq.s32.totalorder %s29, 1
      %p94 = por %p92, %p93
      %p96 = scmp.ne.s32.totalorder %s81, %s95
      %p97 = scmp.eq.s32.totalorder %s29, 0
      %p98 = por %p96, %p97
      %s100 = sadd.s32 %s99, 1
      %p103 = scmp.eq.s32.totalorder %s23, 1
      %p104 = scmp.ne.s32.totalorder %s99, %s101
      %p105 = scmp.eq.s32.totalorder %s23, 0
      %p106 = por %p104, %p105
      %p107 = scmp.ne.s32.totalorder %s99, %s101
      %p108 = scmp.eq.s32.totalorder %s28, 1
      %p109 = por %p107, %p108
      %p110 = scmp.ne.s32.totalorder %s101, %s102
      %p111 = scmp.eq.s32.totalorder %s28, 0
      %p112 = por %p110, %p111
      %p113 = scmp.ne.s32.totalorder %s101, %s102
      %p114 = scmp.eq.s32.totalorder %s29, 1
      %p115 = por %p113, %p114
      %p117 = scmp.ne.s32.totalorder %s102, %s116
      %p118 = scmp.eq.s32.totalorder %s29, 0
      %p119 = por %p117, %p118
      %s121 = sadd.s32 %s120, 1
      %p124 = scmp.eq.s32.totalorder %s23, 1
      %p125 = scmp.ne.s32.totalorder %s120, %s122
      %p126 = scmp.eq.s32.totalorder %s23, 0
      %p127 = por %p125, %p126
      %p128 = scmp.ne.s32.totalorder %s120, %s122
      %p129 = scmp.eq.s32.totalorder %s28, 1
      %p130 = por %p128, %p129
      %p131 = scmp.ne.s32.totalorder %s122, %s123
      %p132 = scmp.eq.s32.totalorder %s28, 0
      %p133 = por %p131, %p132
      %p134 = scmp.ne.s32.totalorder %s122, %s123
      %p135 = scmp.eq.s32.totalorder %s29, 1
      %p136 = por %p134, %p135
      %p138 = scmp.ne.s32.totalorder %s123, %s137
      %p139 = scmp.eq.s32.totalorder %s29, 0
      %p140 = por %p138, %p139
      %s142 = sadd.s32 %s141, 1
      %p145 = scmp.eq.s32.totalorder %s23, 1
      %p146 = scmp.ne.s32.totalorder %s141, %s143
      %p147 = scmp.eq.s32.totalorder %s23, 0
      %p148 = por %p146, %p147
      %p149 = scmp.ne.s32.totalorder %s141, %s143
      %p150 = scmp.eq.s32.totalorder %s28, 1
      %p151 = por %p149, %p150
      %p152 = scmp.ne.s32.totalorder %s143, %s144
      %p153 = scmp.eq.s32.totalorder %s28, 0
      %p154 = por %p152, %p153
      %p155 = scmp.ne.s32.totalorder %s143, %s144
      %p156 = scmp.eq.s32.totalorder %s29, 1
      %p157 = por %p155, %p156
      %p159 = scmp.ne.s32.totalorder %s144, %s158
      %p160 = scmp.eq.s32.totalorder %s29, 0
      %p161 = por %p159, %p160
      %s163 = sadd.s32 %s162, 1
      %p166 = scmp.eq.s32.totalorder %s23, 1
      %p167 = scmp.ne.s32.totalorder %s162, %s164
      %p168 = scmp.eq.s32.totalorder %s23, 0
      %p169 = por %p167, %p168
      %p170 = scmp.ne.s32.totalorder %s162, %s164
      %p171 = scmp.eq.s32.totalorder %s28, 1
      %p172 = por %p170, %p171
      %p173 = scmp.ne.s32.totalorder %s164, %s165
      %p174 = scmp.eq.s32.totalorder %s28, 0
      %p175 = por %p173, %p174
      %p176 = scmp.ne.s32.totalorder %s164, %s165
      %p177 = scmp.eq.s32.totalorder %s29, 1
      %p178 = por %p176, %p177
      %p180 = scmp.ne.s32.totalorder %s165, %s179
      %p181 = scmp.eq.s32.totalorder %s29, 0
      %p182 = por %p180, %p181
      %s184 = sadd.s32 %s183, 1
      %p187 = scmp.eq.s32.totalorder %s23, 1
      %p188 = scmp.ne.s32.totalorder %s183, %s185
      %p189 = scmp.eq.s32.totalorder %s23, 0
      %p190 = por %p188, %p189
      %p191 = scmp.ne.s32.totalorder %s183, %s185
      %p192 = scmp.eq.s32.totalorder %s28, 1
      %p193 = por %p191, %p192
      %p194 = scmp.ne.s32.totalorder %s185, %s186
      %p195 = scmp.eq.s32.totalorder %s28, 0
      %p196 = por %p194, %p195
      %p197 = scmp.ne.s32.totalorder %s185, %s186
      %p198 = scmp.eq.s32.totalorder %s29, 1
      %p199 = por %p197, %p198
      %p201 = scmp.ne.s32.totalorder %s186, %s200
      %p202 = scmp.eq.s32.totalorder %s29, 0
      %p203 = por %p201, %p202
      %s205 = sadd.s32 %s204, 1
      %p208 = scmp.eq.s32.totalorder %s23, 1
      %p209 = scmp.ne.s32.totalorder %s204, %s206
      %p210 = scmp.eq.s32.totalorder %s23, 0
      %p211 = por %p209, %p210
      %p212 = scmp.ne.s32.totalorder %s204, %s206
      %p213 = scmp.eq.s32.totalorder %s28, 1
      %p214 = por %p212, %p213
      %p215 = scmp.ne.s32.totalorder %s206, %s207
      %p216 = scmp.eq.s32.totalorder %s28, 0
      %p217 = por %p215, %p216
      %p218 = scmp.ne.s32.totalorder %s206, %s207
      %p219 = scmp.eq.s32.totalorder %s29, 1
      %p220 = por %p218, %p219
      %p222 = scmp.ne.s32.totalorder %s207, %s221
      %p223 = scmp.eq.s32.totalorder %s29, 0
      %p224 = por %p222, %p223
      %s226 = sadd.s32 %s225, 1
      %p229 = scmp.eq.s32.totalorder %s23, 1
      %p230 = scmp.ne.s32.totalorder %s225, %s227
      %p231 = scmp.eq.s32.totalorder %s23, 0
      %p232 = por %p230, %p231
      %p233 = scmp.ne.s32.totalorder %s225, %s227
      %p234 = scmp.eq.s32.totalorder %s28, 1
      %p235 = por %p233, %p234
      %p236 = scmp.ne.s32.totalorder %s227, %s228
      %p237 = scmp.eq.s32.totalorder %s28, 0
      %p238 = por %p236, %p237
      %p239 = scmp.ne.s32.totalorder %s227, %s228
      %p240 = scmp.eq.s32.totalorder %s29, 1
      %p241 = por %p239, %p240
      %p243 = scmp.ne.s32.totalorder %s228, %s242
      %p244 = scmp.eq.s32.totalorder %s29, 0
      %p245 = por %p243, %p244
      %s247 = sadd.s32 %s246, 1
      %p250 = scmp.eq.s32.totalorder %s23, 1
      %p251 = scmp.ne.s32.totalorder %s246, %s248
      %p252 = scmp.eq.s32.totalorder %s23, 0
      %p253 = por %p251, %p252
      %p254 = scmp.ne.s32.totalorder %s246, %s248
      %p255 = scmp.eq.s32.totalorder %s28, 1
      %p256 = por %p254, %p255
      %p257 = scmp.ne.s32.totalorder %s248, %s249
      %p258 = scmp.eq.s32.totalorder %s28, 0
      %p259 = por %p257, %p258
      %p260 = scmp.ne.s32.totalorder %s248, %s249
      %p261 = scmp.eq.s32.totalorder %s29, 1
      %p262 = por %p260, %p261
      %p264 = scmp.ne.s32.totalorder %s249, %s263
      %p265 = scmp.eq.s32.totalorder %s29, 0
      %p266 = por %p264, %p265
      %s268 = sadd.s32 %s267, 1
      %p271 = scmp.eq.s32.totalorder %s23, 1
      %p272 = scmp.ne.s32.totalorder %s267, %s269
      %p273 = scmp.eq.s32.totalorder %s23, 0
      %p274 = por %p272, %p273
      %p275 = scmp.ne.s32.totalorder %s267, %s269
      %p276 = scmp.eq.s32.totalorder %s28, 1
      %p277 = por %p275, %p276
      %p278 = scmp.ne.s32.totalorder %s269, %s270
      %p279 = scmp.eq.s32.totalorder %s28, 0
      %p280 = por %p278, %p279
      %p281 = scmp.ne.s32.totalorder %s269, %s270
      %p282 = scmp.eq.s32.totalorder %s29, 1
      %p283 = por %p281, %p282
      %p285 = scmp.ne.s32.totalorder %s270, %s284
      %p286 = scmp.eq.s32.totalorder %s29, 0
      %p287 = por %p285, %p286
      %s289 = sadd.s32 %s288, 1
      %p292 = scmp.eq.s32.totalorder %s23, 1
      %p293 = scmp.ne.s32.totalorder %s288, %s290
      %p294 = scmp.eq.s32.totalorder %s23, 0
      %p295 = por %p293, %p294
      %p296 = scmp.ne.s32.totalorder %s288, %s290
      %p297 = scmp.eq.s32.totalorder %s28, 1
      %p298 = por %p296, %p297
      %p299 = scmp.ne.s32.totalorder %s290, %s291
      %p300 = scmp.eq.s32.totalorder %s28, 0
      %p301 = por %p299, %p300
      %p302 = scmp.ne.s32.totalorder %s290, %s291
      %p303 = scmp.eq.s32.totalorder %s29, 1
      %p304 = por %p302, %p303
      %p306 = scmp.ne.s32.totalorder %s291, %s305
      %p307 = scmp.eq.s32.totalorder %s29, 0
      %p308 = por %p306, %p307
      %s309 = ssub.s32 %s23, %s30
      %p310 = scmp.eq.s32.totalorder %s309, 0
      %s312 = sadd.s32 %s311, 1
      %s313 = scalar_select %p310, %s311, %s312
      %p316 = pneg %p310
      %p317 = scmp.eq.s32.totalorder %s23, 1
      %p318 = por %p316, %p317
      %p319 = scmp.ne.s32.totalorder %s311, %s314
      %p320 = scmp.eq.s32.totalorder %s23, 0
      %p321 = por %p319, %p320
      %p322 = scmp.ne.s32.totalorder %s311, %s314
      %p323 = scmp.eq.s32.totalorder %s28, 1
      %p324 = por %p322, %p323
      %p325 = scmp.ne.s32.totalorder %s314, %s315
      %p326 = scmp.eq.s32.totalorder %s28, 0
      %p327 = por %p325, %p326
      %p328 = scmp.ne.s32.totalorder %s314, %s315
      %p329 = scmp.eq.s32.totalorder %s29, 1
      %p330 = por %p328, %p329
      %p332 = scmp.ne.s32.totalorder %s315, %s331
      %p333 = scmp.eq.s32.totalorder %s29, 0
      %p334 = por %p332, %p333
      %p335 = scmp.le.s32.totalorder 1, %s23
      %p336 = scmp.lt.s32.totalorder %s23, 3
      %p337 = pnand %p335, %p336
      %p338 = pneg %p337
      // Predicated region
      $region9: #{tpu_custom_call.1} parent=5 // pred_check
        _
      $region10: #{tpu_custom_call.1} parent=5 // pred_check_branch
        %340 = sbr.rel (%p337) target = $region12
      $region11: #{tpu_custom_call.1} parent=5 // pred_region
        %s341 = ssub.s32 %s23, 1
        // Predicated region
        $region13: #{tpu_custom_call.1} parent=11 // pred_check
          %p342 = pneg %p70
        $region14: #{tpu_custom_call.1} parent=11 // pred_check_branch
          %344 = sbr.rel (%p342) target = $region16
        $region15: #{tpu_custom_call.1} parent=11 // pred_region
          _
        $region16: #{tpu_custom_call.1} parent=11 // pred_fallthru
          _
        // Predicated region
        $region17: #{tpu_custom_call.1} parent=11 // pred_check
          %p345 = pneg %p91
        $region18: #{tpu_custom_call.1} parent=11 // pred_check_branch
          %347 = sbr.rel (%p345) target = $region20
        $region19: #{tpu_custom_call.1} parent=11 // pred_region
          _
        $region20: #{tpu_custom_call.1} parent=11 // pred_fallthru
          _
        // Predicated region
        $region21: #{tpu_custom_call.1} parent=11 // pred_check
          %p348 = pneg %p112
        $region22: #{tpu_custom_call.1} parent=11 // pred_check_branch
          %350 = sbr.rel (%p348) target = $region24
        $region23: #{tpu_custom_call.1} parent=11 // pred_region
          _
        $region24: #{tpu_custom_call.1} parent=11 // pred_fallthru
          _
        // Predicated region
        $region25: #{tpu_custom_call.1} parent=11 // pred_check
          %p351 = pneg %p133
        $region26: #{tpu_custom_call.1} parent=11 // pred_check_branch
          %353 = sbr.rel (%p351) target = $region28
        $region27: #{tpu_custom_call.1} parent=11 // pred_region
          _
        $region28: #{tpu_custom_call.1} parent=11 // pred_fallthru
          _
        // Predicated region
        $region29: #{tpu_custom_call.1} parent=11 // pred_check
          %p354 = pneg %p154
        $region30: #{tpu_custom_call.1} parent=11 // pred_check_branch
          %356 = sbr.rel (%p354) target = $region32
        $region31: #{tpu_custom_call.1} parent=11 // pred_region
          %358 = vsyncadd [#allocation3], 0
          %s359 = sshll.u32 %s5, 4
          %s360 = int_to_ptr.hbm [resolvable:$true] %s359
          %s361 = sshll.u32 [#allocation2], 4
          %s362 = int_to_ptr.vmem [resolvable:$true] %s361
          %367 = dma.hbm_to_vmem [thread:$0]  %s360, 256, %s362, [#allocation3], 64, 64, 4
        $region32: #{tpu_custom_call.1} parent=11 // pred_fallthru
          _
        // Predicated region
        $region33: #{tpu_custom_call.1} parent=11 // pred_check
          %p368 = pneg %p175
        $region34: #{tpu_custom_call.1} parent=11 // pred_check_branch
          %370 = sbr.rel (%p368) target = $region36
        $region35: #{tpu_custom_call.1} parent=11 // pred_region
          _
        $region36: #{tpu_custom_call.1} parent=11 // pred_fallthru
          _
        // Predicated region
        $region37: #{tpu_custom_call.1} parent=11 // pred_check
          %p371 = pneg %p196
        $region38: #{tpu_custom_call.1} parent=11 // pred_check_branch
          %373 = sbr.rel (%p371) target = $region40
        $region39: #{tpu_custom_call.1} parent=11 // pred_region
          _
        $region40: #{tpu_custom_call.1} parent=11 // pred_fallthru
          _
        // Predicated region
        $region41: #{tpu_custom_call.1} parent=11 // pred_check
          %p374 = pneg %p217
        $region42: #{tpu_custom_call.1} parent=11 // pred_check_branch
          %376 = sbr.rel (%p374) target = $region44
        $region43: #{tpu_custom_call.1} parent=11 // pred_region
          _
        $region44: #{tpu_custom_call.1} parent=11 // pred_fallthru
          _
        // Predicated region
        $region45: #{tpu_custom_call.1} parent=11 // pred_check
          %p377 = pneg %p238
        $region46: #{tpu_custom_call.1} parent=11 // pred_check_branch
          %379 = sbr.rel (%p377) target = $region48
        $region47: #{tpu_custom_call.1} parent=11 // pred_region
          _
        $region48: #{tpu_custom_call.1} parent=11 // pred_fallthru
          _
        // Predicated region
        $region49: #{tpu_custom_call.1} parent=11 // pred_check
          %p380 = pneg %p259
        $region50: #{tpu_custom_call.1} parent=11 // pred_check_branch
          %382 = sbr.rel (%p380) target = $region52
        $region51: #{tpu_custom_call.1} parent=11 // pred_region
          _
        $region52: #{tpu_custom_call.1} parent=11 // pred_fallthru
          _
        // Predicated region
        $region53: #{tpu_custom_call.1} parent=11 // pred_check
          %p383 = pneg %p280
        $region54: #{tpu_custom_call.1} parent=11 // pred_check_branch
          %385 = sbr.rel (%p383) target = $region56
        $region55: #{tpu_custom_call.1} parent=11 // pred_region
          _
        $region56: #{tpu_custom_call.1} parent=11 // pred_fallthru
          _
        // Predicated region
        $region57: #{tpu_custom_call.1} parent=11 // pred_check
          %p386 = pneg %p301
        $region58: #{tpu_custom_call.1} parent=11 // pred_check_branch
          %388 = sbr.rel (%p386) target = $region60
        $region59: #{tpu_custom_call.1} parent=11 // pred_region
          _
        $region60: #{tpu_custom_call.1} parent=11 // pred_fallthru
          _
      $region12: #{tpu_custom_call.1} parent=5 // pred_fallthru
        _
      %p389 = scmp.lt.s32.totalorder %s23, 2
      // Predicated region
      $region61: #{tpu_custom_call.1} parent=5 // pred_check
        %p390 = pneg %p389
      $region62: #{tpu_custom_call.1} parent=5 // pred_check_branch
        %392 = sbr.rel (%p390) target = $region64
      $region63: #{tpu_custom_call.1} parent=5 // pred_region
        // Predicated region
        $region65: #{tpu_custom_call.1} parent=63 // pred_check
          %p393 = pneg %p43
        $region66: #{tpu_custom_call.1} parent=63 // pred_check_branch
          %395 = sbr.rel (%p393) target = $region68
        $region67: #{tpu_custom_call.1} parent=63 // pred_region
          %p396 = scmp.lt.s32.totalorder %s23, 1
          %s397 = scalar_select %p396, %s23, 1
          %s398 = smul.addr %s397, 8
          %s399 = scalar_lea.vmem %s0, %s398
        $region68: #{tpu_custom_call.1} parent=63 // pred_fallthru
          _
      $region64: #{tpu_custom_call.1} parent=5 // pred_fallthru
        _
      %p400 = scmp.le.s32.totalorder 1, %s23
      %p401 = scmp.lt.s32.totalorder %s23, 3
      %p402 = pnand %p400, %p401
      %p403 = pneg %p402
      // Predicated region
      $region69: #{tpu_custom_call.1} parent=5 // pred_check
        _
      $region70: #{tpu_custom_call.1} parent=5 // pred_check_branch
        %405 = sbr.rel (%p402) target = $region72
      $region71: #{tpu_custom_call.1} parent=5 // pred_region
        %s406 = ssub.s32 %s23, 1
        // Predicated region
        $region73: #{tpu_custom_call.1} parent=71 // pred_check
          %p407 = pneg %p154
        $region74: #{tpu_custom_call.1} parent=71 // pred_check_branch
          %409 = sbr.rel (%p407) target = $region76
        $region75: #{tpu_custom_call.1} parent=71 // pred_region
          %411 = dma.done [#allocation3], 256
        $region76: #{tpu_custom_call.1} parent=71 // pred_fallthru
          _
        %p412 = scmp.lt.s32.totalorder %s28, 1
        %s413 = scalar_select %p412, %s28, 1
        %s414 = smul.addr %s413, 8
        %s415 = scalar_lea.vmem %s0, %s414
        %p416 = pneg %p49
        %p417 = pneg %p46
        %p418 = pneg %p70
        %p419 = pneg %p67
        %p420 = pneg %p91
        %p421 = pneg %p88
        %p422 = pneg %p112
        %p423 = pneg %p109
        %p424 = pneg %p133
        %p425 = pneg %p130
        %p426 = pneg %p154
        %p427 = pneg %p151
        %p428 = pneg %p175
        %p429 = pneg %p172
        %p430 = pneg %p196
        %p431 = pneg %p193
        %p432 = pneg %p217
        %p433 = pneg %p214
        %p434 = pneg %p238
        %p435 = pneg %p235
        %p436 = pneg %p259
        %p437 = pneg %p256
        %p438 = pneg %p280
        %p439 = pneg %p277
        %p440 = pneg %p301
        %p441 = pneg %p298
        %p442 = pneg %p327
        %p443 = pneg %p324
        %s444 = sand.u32 %s314, 1
        %s445 = scalar_lea.sflag [#allocation4], %s444
        %s446 = sand.u32 %s314, 1
        %s447 = smul.addr %s446, 8
        %s448 = scalar_lea.vmem [#allocation5], %s447
        %p449 = scmp.lt.s32.totalorder %s28, 1
        %s450 = scalar_select %p449, %s28, 1
        %s451 = smul.addr %s450, 8
        %s452 = scalar_lea.vmem %s0, %s451
        %v454 = vld [vmem:[%s452] sm:$0xff]
        %v455 = vpack.c.bf16 %v454, %v454
        %v456 = vld [vmem:[%s1] sm:$0xf]
        %v457 = vld [vmem:[%s1 + $0x4] sm:$0xf]
        %v458 = vld [vmem:[%s1 + $0x8] sm:$0xf]
        %v459 = vld [vmem:[%s1 + $0xc] sm:$0xf]
        %v460 = vld [vmem:[%s2] sm:$0x1]
        %v462 = vperm.slane %v460, 0
        %v468 = vunpack.c.l.b16 %v456
        %v469 = vunpack.c.l.b16 %v457
        %v470 = vunpack.c.l.b16 %v458
        %v471 = vunpack.c.l.b16 %v459
        %v472 = vpack.c.b16 %v469, %v468
        %v473 = vpack.c.b16 %v471, %v470
        %vm476 = vcmask 261120
        %v478 = vsel %vm476, %v455, 0
        %480 = vmatpush.bf16.msra.mxu0 0
        %481 = vmatpush.bf16.msra.mxu0 0
        %482 = vmatpush.bf16.msra.mxu0 0
        %483 = vmatpush.bf16.msra.mxu0 0
        %484 = vmatpush.bf16.msra.mxu0 0
        %485 = vmatpush.bf16.msra.mxu0 0
        %486 = vmatpush.bf16.msra.mxu0 %v473
        %487 = vmatpush.bf16.msra.mxu0 %v472
        %488 = vmatmul.bf16.gmra.mxu0 %v478
        %v489 = vpop.f32.mrf.mxu0
        %v490 = vadd.f32 %v462, %v489
        %v491 = vpop.f32.mrf.mxu0
        %492 = vdwg.mxu0
        %v493 = vpack.c.bf16 %v490, %v490
        %v495 = vunpack.c.l.b16 %v493
        %v496 = vpack.c.b16 %v495, %v495
        %497 = vrot.lane.b32.xlu0 %v496, 96
        %v498 = vpop.permute.xlu0 %497
        %vm499 = vcmask 64512
        %v501 = vsel %vm499, %v493, 0
        %v504 = vsel %vm499, %v498, 0
        %506 = vmatpush.bf16.xpose.msra.mxu0 0
        %507 = vmatpush.bf16.xpose.msra.mxu0 0
        %508 = vmatpush.bf16.xpose.msra.mxu0 0
        %509 = vmatpush.bf16.xpose.msra.mxu0 0
        %510 = vmatpush.bf16.xpose.msra.mxu0 0
        %511 = vmatpush.bf16.xpose.msra.mxu0 0
        %512 = vmatpush.bf16.xpose.msra.mxu0 0
        %513 = vmatpush.bf16.xpose.msra.mxu0 %v504
        %514 = vmatmul.bf16.gmra.mxu0 %v501
        %v515 = vpop.f32.mrf.mxu0
        %v516 = vadd.f32 0.0, %v515
        %v517 = vpop.f32.mrf.mxu0
        %518 = vdwg.mxu0
        %v519 = vsel %vm499, %v516, -inf
        %520 = vmax.xlane.f32.xlu0 %v519
        %v521 = vpop.xlane.xlu0 %520
        %v522 = vsub.f32 %v516, %v521
        %v523 = vmul.f32 %v522, 1.442695
        %v524 = vpow.pop %v523
        %v525 = vsel %vm499, %v524, 0.0
        %526 = vadd.xlane.f32.xlu0 %v525
        %v527 = vpop.xlane.xlu0 %526
        %v528 = vpack.c.bf16 %v524, %v524
        %529 = vrot.lane.b32.xlu0 %v496, 64
        %v530 = vpop.permute.xlu0 %529
        %v532 = vsel %vm499, %v528, 0
        %vm534 = vcmask 1043456
        %v536 = vsel %vm534, %v530, 0
        %538 = vmatpush.bf16.msra.mxu0 0
        %539 = vmatpush.bf16.msra.mxu0 0
        %540 = vmatpush.bf16.msra.mxu0 0
        %541 = vmatpush.bf16.msra.mxu0 0
        %542 = vmatpush.bf16.msra.mxu0 0
        %543 = vmatpush.bf16.msra.mxu0 0
        %544 = vmatpush.bf16.msra.mxu0 0
        %545 = vmatpush.bf16.msra.mxu0 %v536
        %546 = vmatmul.bf16.gmra.mxu0 %v532
        %v547 = vpop.f32.mrf.mxu0
        %v548 = vadd.f32 0.0, %v547
        %v549 = vpop.f32.mrf.mxu0
        %550 = vdwg.mxu0
        %v551 = vrcp.pop %v527
        %v552 = vmul.f32 %v548, %v551
        %553 = vrot.lane.b32.xlu0 %v496, 120
        %v554 = vpop.permute.xlu0 %553
        %555 = vrot.lane.b32.xlu0 %v496, 88
        %v556 = vpop.permute.xlu0 %555
        %v558 = vsel %vm499, %v554, 0
        %v561 = vsel %vm499, %v556, 0
        %563 = vmatpush.bf16.xpose.msra.mxu0 0
        %564 = vmatpush.bf16.xpose.msra.mxu0 0
        %565 = vmatpush.bf16.xpose.msra.mxu0 0
        %566 = vmatpush.bf16.xpose.msra.mxu0 0
        %567 = vmatpush.bf16.xpose.msra.mxu0 0
        %568 = vmatpush.bf16.xpose.msra.mxu0 0
        %569 = vmatpush.bf16.xpose.msra.mxu0 0
        %570 = vmatpush.bf16.xpose.msra.mxu0 %v561
        %571 = vmatmul.bf16.gmra.mxu0 %v558
        %v572 = vpop.f32.mrf.mxu0
        %v573 = vadd.f32 0.0, %v572
        %v574 = vpop.f32.mrf.mxu0
        %575 = vdwg.mxu0
        %v576 = vsel %vm499, %v573, -inf
        %577 = vmax.xlane.f32.xlu0 %v576
        %v578 = vpop.xlane.xlu0 %577
        %v579 = vsub.f32 %v573, %v578
        %v580 = vmul.f32 %v579, 1.442695
        %v581 = vpow.pop %v580
        %v582 = vsel %vm499, %v581, 0.0
        %583 = vadd.xlane.f32.xlu0 %v582
        %v584 = vpop.xlane.xlu0 %583
        %v585 = vpack.c.bf16 %v581, %v581
        %586 = vrot.lane.b32.xlu0 %v496, 56
        %v587 = vpop.permute.xlu0 %586
        %v589 = vsel %vm499, %v585, 0
        %v592 = vsel %vm534, %v587, 0
        %594 = vmatpush.bf16.msra.mxu0 0
        %595 = vmatpush.bf16.msra.mxu0 0
        %596 = vmatpush.bf16.msra.mxu0 0
        %597 = vmatpush.bf16.msra.mxu0 0
        %598 = vmatpush.bf16.msra.mxu0 0
        %599 = vmatpush.bf16.msra.mxu0 0
        %600 = vmatpush.bf16.msra.mxu0 0
        %601 = vmatpush.bf16.msra.mxu0 %v592
        %602 = vmatmul.bf16.gmra.mxu0 %v589
        %v603 = vpop.f32.mrf.mxu0
        %v604 = vadd.f32 0.0, %v603
        %v605 = vpop.f32.mrf.mxu0
        %606 = vdwg.mxu0
        %v607 = vrcp.pop %v584
        %v608 = vmul.f32 %v604, %v607
        %609 = vrot.lane.b32.xlu0 %v496, 112
        %v610 = vpop.permute.xlu0 %609
        %611 = vrot.lane.b32.xlu0 %v496, 80
        %v612 = vpop.permute.xlu0 %611
        %v614 = vsel %vm499, %v610, 0
        %v617 = vsel %vm499, %v612, 0
        %619 = vmatpush.bf16.xpose.msra.mxu0 0
        %620 = vmatpush.bf16.xpose.msra.mxu0 0
        %621 = vmatpush.bf16.xpose.msra.mxu0 0
        %622 = vmatpush.bf16.xpose.msra.mxu0 0
        %623 = vmatpush.bf16.xpose.msra.mxu0 0
        %624 = vmatpush.bf16.xpose.msra.mxu0 0
        %625 = vmatpush.bf16.xpose.msra.mxu0 0
        %626 = vmatpush.bf16.xpose.msra.mxu0 %v617
        %627 = vmatmul.bf16.gmra.mxu0 %v614
        %v628 = vpop.f32.mrf.mxu0
        %v629 = vadd.f32 0.0, %v628
        %v630 = vpop.f32.mrf.mxu0
        %631 = vdwg.mxu0
        %v632 = vsel %vm499, %v629, -inf
        %633 = vmax.xlane.f32.xlu0 %v632
        %v634 = vpop.xlane.xlu0 %633
        %v635 = vsub.f32 %v629, %v634
        %v636 = vmul.f32 %v635, 1.442695
        %v637 = vpow.pop %v636
        %v638 = vsel %vm499, %v637, 0.0
        %639 = vadd.xlane.f32.xlu0 %v638
        %v640 = vpop.xlane.xlu0 %639
        %v641 = vpack.c.bf16 %v637, %v637
        %642 = vrot.lane.b32.xlu0 %v496, 48
        %v643 = vpop.permute.xlu0 %642
        %v645 = vsel %vm499, %v641, 0
        %v648 = vsel %vm534, %v643, 0
        %650 = vmatpush.bf16.msra.mxu0 0
        %651 = vmatpush.bf16.msra.mxu0 0
        %652 = vmatpush.bf16.msra.mxu0 0
        %653 = vmatpush.bf16.msra.mxu0 0
        %654 = vmatpush.bf16.msra.mxu0 0
        %655 = vmatpush.bf16.msra.mxu0 0
        %656 = vmatpush.bf16.msra.mxu0 0
        %657 = vmatpush.bf16.msra.mxu0 %v648
        %658 = vmatmul.bf16.gmra.mxu0 %v645
        %v659 = vpop.f32.mrf.mxu0
        %v660 = vadd.f32 0.0, %v659
        %v661 = vpop.f32.mrf.mxu0
        %662 = vdwg.mxu0
        %v663 = vrcp.pop %v640
        %v664 = vmul.f32 %v660, %v663
        %665 = vrot.lane.b32.xlu0 %v496, 104
        %v666 = vpop.permute.xlu0 %665
        %667 = vrot.lane.b32.xlu0 %v496, 72
        %v668 = vpop.permute.xlu0 %667
        %v670 = vsel %vm499, %v666, 0
        %v673 = vsel %vm499, %v668, 0
        %675 = vmatpush.bf16.xpose.msra.mxu0 0
        %676 = vmatpush.bf16.xpose.msra.mxu0 0
        %677 = vmatpush.bf16.xpose.msra.mxu0 0
        %678 = vmatpush.bf16.xpose.msra.mxu0 0
        %679 = vmatpush.bf16.xpose.msra.mxu0 0
        %680 = vmatpush.bf16.xpose.msra.mxu0 0
        %681 = vmatpush.bf16.xpose.msra.mxu0 0
        %682 = vmatpush.bf16.xpose.msra.mxu0 %v673
        %683 = vmatmul.bf16.gmra.mxu0 %v670
        %v684 = vpop.f32.mrf.mxu0
        %v685 = vadd.f32 0.0, %v684
        %v686 = vpop.f32.mrf.mxu0
        %687 = vdwg.mxu0
        %v688 = vsel %vm499, %v685, -inf
        %689 = vmax.xlane.f32.xlu0 %v688
        %v690 = vpop.xlane.xlu0 %689
        %v691 = vsub.f32 %v685, %v690
        %v692 = vmul.f32 %v691, 1.442695
        %v693 = vpow.pop %v692
        %v694 = vsel %vm499, %v693, 0.0
        %695 = vadd.xlane.f32.xlu0 %v694
        %v696 = vpop.xlane.xlu0 %695
        %v697 = vpack.c.bf16 %v693, %v693
        %698 = vrot.lane.b32.xlu0 %v496, 40
        %v699 = vpop.permute.xlu0 %698
        %v701 = vsel %vm499, %v697, 0
        %v704 = vsel %vm534, %v699, 0
        %706 = vmatpush.bf16.msra.mxu0 0
        %707 = vmatpush.bf16.msra.mxu0 0
        %708 = vmatpush.bf16.msra.mxu0 0
        %709 = vmatpush.bf16.msra.mxu0 0
        %710 = vmatpush.bf16.msra.mxu0 0
        %711 = vmatpush.bf16.msra.mxu0 0
        %712 = vmatpush.bf16.msra.mxu0 0
        %713 = vmatpush.bf16.msra.mxu0 %v704
        %714 = vmatmul.bf16.gmra.mxu0 %v701
        %v715 = vpop.f32.mrf.mxu0
        %v716 = vadd.f32 0.0, %v715
        %v717 = vpop.f32.mrf.mxu0
        %718 = vdwg.mxu0
        %v719 = vrcp.pop %v696
        %v720 = vmul.f32 %v716, %v719
        %722 = vrot.lane.b32.xlu0 %v608, 8
        %v723 = vpop.permute.xlu0 %722
        %726 = vrot.lane.b32.xlu0 %v664, 16
        %v727 = vpop.permute.xlu0 %726
        %730 = vrot.lane.b32.xlu0 %v720, 24
        %v731 = vpop.permute.xlu0 %730
        %v733 = vsel %vm499, %v552, %v723
        %vm734 = vcmask 130048
        %v735 = vsel %vm734, %v733, %v727
        %vm736 = vcmask 195584
        %v737 = vsel %vm736, %v735, %v731
        %v738 = vpack.c.bf16 %v737, %v737
        %v739 = vld [vmem:[%s3] sm:$0xf]
        %v740 = vld [vmem:[%s3 + $0x4] sm:$0xf]
        %v741 = vld [vmem:[%s3 + $0x8] sm:$0xf]
        %v742 = vld [vmem:[%s3 + $0xc] sm:$0xf]
        %v743 = vld [vmem:[%s4] sm:$0x1]
        %v745 = vperm.slane %v743, 0
        %v751 = vunpack.c.l.b16 %v739
        %v752 = vunpack.c.l.b16 %v740
        %v753 = vunpack.c.l.b16 %v741
        %v754 = vunpack.c.l.b16 %v742
        %v755 = vpack.c.b16 %v752, %v751
        %v756 = vpack.c.b16 %v754, %v753
        %v760 = vsel %vm476, %v738, 0
        %762 = vmatpush.bf16.msra.mxu0 0
        %763 = vmatpush.bf16.msra.mxu0 0
        %764 = vmatpush.bf16.msra.mxu0 0
        %765 = vmatpush.bf16.msra.mxu0 0
        %766 = vmatpush.bf16.msra.mxu0 0
        %767 = vmatpush.bf16.msra.mxu0 0
        %768 = vmatpush.bf16.msra.mxu0 %v756
        %769 = vmatpush.bf16.msra.mxu0 %v755
        %770 = vmatmul.bf16.gmra.mxu0 %v760
        %v771 = vpop.f32.mrf.mxu0
        %v772 = vadd.f32 %v745, %v771
        %v773 = vpop.f32.mrf.mxu0
        %774 = vdwg.mxu0
        %v775 = vadd.f32 %v454, %v772
        %v776 = vsel %vm476, %v775, 0.0
        %777 = vadd.xlane.f32.xlu0 %v776
        %v778 = vpop.xlane.xlu0 %777
        %v779 = vrcp.pop 32.0
        %v780 = vmul.f32 32.0, %v779
        %v781 = vsub.f32 1.0, %v780
        %v782 = vmul.f32 %v779, %v781
        %v783 = vadd.f32 %v779, %v782
        %vm784 = vweird.f32 %v779
        %v785 = vsel %vm784, %v779, %v783
        %v786 = vmul.f32 %v778, %v785
        %v787 = vsub.f32 %v775, %v786
        %v788 = vmul.f32 %v787, %v787
        %v789 = vsel %vm476, %v788, 0.0
        %790 = vadd.xlane.f32.xlu0 %v789
        %v791 = vpop.xlane.xlu0 %790
        %v792 = vmul.f32 %v791, %v785
        %v793 = vadd.f32 %v792, 1e-05
        %v794 = vrsqrt.pop %v793
        %v795 = vmul.f32 %v794, %v793
        %v796 = vmul.f32 %v795, %v794
        %v797 = vmul.f32 0.5, %v796
        %v798 = vsub.f32 1.5, %v797
        %v799 = vmul.f32 %v794, %v798
        %vm800 = vweird.f32 %v793
        %vm801 = vweird.f32 %v794
        %vm802 = vmor %vm800, %vm801
        %v803 = vsel %vm802, %v794, %v799
        %v804 = vmul.f32 %v787, %v803
        %v805 = vld [vmem:[%s9] sm:$0x1]
        %v807 = vperm.slane %v805, 0
        %v809 = vmul.f32 %v804, %v807
        %v810 = vld [vmem:[%s10] sm:$0x1]
        %v812 = vperm.slane %v810, 0
        %v814 = vadd.f32 %v809, %v812
        %v815 = vpack.c.bf16 %v814, %v814
        %v816 = vld [vmem:[#allocation2] sm:$0xf]
        %v817 = vld [vmem:[#allocation2 + $0x4] sm:$0xf]
        %v818 = vld [vmem:[#allocation2 + $0x8] sm:$0xf]
        %v819 = vld [vmem:[#allocation2 + $0xc] sm:$0xf]
        %v820 = vld [vmem:[%s6] sm:$0x1]
        %v822 = vperm.slane %v820, 0
        %v828 = vunpack.c.l.b16 %v816
        %v829 = vunpack.c.l.b16 %v817
        %v830 = vunpack.c.l.b16 %v818
        %v831 = vunpack.c.l.b16 %v819
        %v832 = vpack.c.b16 %v829, %v828
        %v833 = vpack.c.b16 %v831, %v830
        %v837 = vsel %vm476, %v815, 0
        %839 = vmatpush.bf16.msra.mxu0 0
        %840 = vmatpush.bf16.msra.mxu0 0
        %841 = vmatpush.bf16.msra.mxu0 0
        %842 = vmatpush.bf16.msra.mxu0 0
        %843 = vmatpush.bf16.msra.mxu0 0
        %844 = vmatpush.bf16.msra.mxu0 0
        %845 = vmatpush.bf16.msra.mxu0 %v833
        %846 = vmatpush.bf16.msra.mxu0 %v832
        %847 = vmatmul.bf16.gmra.mxu0 %v837
        %v848 = vpop.f32.mrf.mxu0
        %v849 = vadd.f32 %v822, %v848
        %v850 = vpop.f32.mrf.mxu0
        %851 = vdwg.mxu0
        %v852 = vmax.f32 %v849, 0.0
        %v853 = vpack.c.bf16 %v852, %v852
        %v854 = vld [vmem:[%s7] sm:$0xf]
        %v855 = vld [vmem:[%s7 + $0x4] sm:$0xf]
        %v856 = vld [vmem:[%s7 + $0x8] sm:$0xf]
        %v857 = vld [vmem:[%s7 + $0xc] sm:$0xf]
        %v858 = vld [vmem:[%s7 + $0x10] sm:$0xf]
        %v859 = vld [vmem:[%s7 + $0x14] sm:$0xf]
        %v860 = vld [vmem:[%s7 + $0x18] sm:$0xf]
        %v861 = vld [vmem:[%s7 + $0x1c] sm:$0xf]
        %v862 = vld [vmem:[%s8] sm:$0x1]
        %v864 = vperm.slane %v862, 0
        %v874 = vunpack.c.l.b16 %v854
        %v875 = vunpack.c.l.b16 %v855
        %v876 = vunpack.c.l.b16 %v856
        %v877 = vunpack.c.l.b16 %v857
        %v878 = vunpack.c.l.b16 %v858
        %v879 = vunpack.c.l.b16 %v859
        %v880 = vunpack.c.l.b16 %v860
        %v881 = vunpack.c.l.b16 %v861
        %v882 = vpack.c.b16 %v875, %v874
        %v883 = vpack.c.b16 %v877, %v876
        %v884 = vpack.c.b16 %v879, %v878
        %v885 = vpack.c.b16 %v881, %v880
        %vm890 = vcmask 523264
        %v892 = vsel %vm890, %v853, 0
        %894 = vmatpush.bf16.msra.mxu0 0
        %895 = vmatpush.bf16.msra.mxu0 0
        %896 = vmatpush.bf16.msra.mxu0 0
        %897 = vmatpush.bf16.msra.mxu0 0
        %898 = vmatpush.bf16.msra.mxu0 %v885
        %899 = vmatpush.bf16.msra.mxu0 %v884
        %900 = vmatpush.bf16.msra.mxu0 %v883
        %901 = vmatpush.bf16.msra.mxu0 %v882
        %902 = vmatmul.bf16.gmra.mxu0 %v892
        %v903 = vpop.f32.mrf.mxu0
        %v904 = vadd.f32 %v864, %v903
        %v905 = vpop.f32.mrf.mxu0
        %906 = vdwg.mxu0
        %v907 = vadd.f32 %v814, %v904
        %v908 = vsel %vm476, %v907, 0.0
        %909 = vadd.xlane.f32.xlu0 %v908
        %v910 = vpop.xlane.xlu0 %909
        %v911 = vmul.f32 %v910, %v785
        %v912 = vsub.f32 %v907, %v911
        %v913 = vmul.f32 %v912, %v912
        %v914 = vsel %vm476, %v913, 0.0
        %915 = vadd.xlane.f32.xlu0 %v914
        %v916 = vpop.xlane.xlu0 %915
        %v917 = vmul.f32 %v916, %v785
        %v918 = vadd.f32 %v917, 1e-05
        %v919 = vrsqrt.pop %v918
        %v920 = vmul.f32 %v919, %v918
        %v921 = vmul.f32 %v920, %v919
        %v922 = vmul.f32 0.5, %v921
        %v923 = vsub.f32 1.5, %v922
        %v924 = vmul.f32 %v919, %v923
        %vm925 = vweird.f32 %v918
        %vm926 = vweird.f32 %v919
        %vm927 = vmor %vm925, %vm926
        %v928 = vsel %vm927, %v919, %v924
        %v929 = vmul.f32 %v912, %v928
        %v930 = vld [vmem:[%s11] sm:$0x1]
        %v932 = vperm.slane %v930, 0
        %v934 = vmul.f32 %v929, %v932
        %v935 = vld [vmem:[%s12] sm:$0x1]
        %v937 = vperm.slane %v935, 0
        %v939 = vadd.f32 %v934, %v937
        %940 = vst.msk [vmem:[%s448] sm:$0xff] %vm476, %v939
        %s941 = sand.u32 %s314, 1
        %s942 = scalar_lea.sflag [#allocation4], %s941
        %s943 = sand.u32 %s314, 1
        %s944 = smul.addr %s943, 8
        %s945 = scalar_lea.vmem [#allocation5], %s944
        // Predicated region
        $region77: #{tpu_custom_call.1} parent=71 // pred_check
          %p946 = pneg %p324
        $region78: #{tpu_custom_call.1} parent=71 // pred_check_branch
          %948 = sbr.rel (%p946) target = $region80
        $region79: #{tpu_custom_call.1} parent=71 // pred_region
          %950 = vsyncadd %s942, 0
          %s951 = smul.addr %s28, 8
          %s952 = scalar_lea.hbm %s13, %s951
          %s954 = sshll.u32 %s945, 4
          %s955 = int_to_ptr.vmem [resolvable:$true] %s954
          %s956 = sshll.u32 %s952, 4
          %s957 = int_to_ptr.hbm [resolvable:$true] %s956
          %959 = dma.vmem_to_hbm [thread:$0]  %s955, 128, %s957, %s942
        $region80: #{tpu_custom_call.1} parent=71 // pred_fallthru
          _
      $region72: #{tpu_custom_call.1} parent=5 // pred_fallthru
        _
      %p960 = scmp.le.s32.totalorder 2, %s23
      // Predicated region
      $region81: #{tpu_custom_call.1} parent=5 // pred_check
        %p961 = pneg %p960
      $region82: #{tpu_custom_call.1} parent=5 // pred_check_branch
        %963 = sbr.rel (%p961) target = $region84
      $region83: #{tpu_custom_call.1} parent=5 // pred_region
        %s964 = ssub.s32 %s23, 2
        // Predicated region
        $region85: #{tpu_custom_call.1} parent=83 // pred_check
          %p965 = pneg %p330
        $region86: #{tpu_custom_call.1} parent=83 // pred_check_branch
          %967 = sbr.rel (%p965) target = $region88
        $region87: #{tpu_custom_call.1} parent=83 // pred_region
          %s968 = sand.u32 %s315, 1
          %s969 = scalar_lea.sflag [#allocation4], %s968
          %s970 = sand.u32 %s315, 1
          %s971 = smul.addr %s970, 8
          %s972 = scalar_lea.vmem [#allocation5], %s971
          %974 = dma.done %s969, 128
        $region88: #{tpu_custom_call.1} parent=83 // pred_fallthru
          _
      $region84: #{tpu_custom_call.1} parent=5 // pred_fallthru
        _
    $region6: #{tpu_custom_call.1} parent=1 // loop_footer
      %s27 = sadd.s32 1, %s23
    $region7: #{tpu_custom_call.1} parent=1 // loop_footer_branch
      %22 = sbr.rel target = $region3
    $region8: #{tpu_custom_call.1} parent=1 // loop_exit
      _
    %975 = vsyncpa [#allocation3], 1
    %s976 = scalar_lea.sflag [#allocation3], 1
    %977 = vsyncpa %s976, 1
    %978 = vsyncpa [#allocation4], 1
    %s979 = scalar_lea.sflag [#allocation4], 1
    %980 = vsyncpa %s979, 1

</llo_original>
